<compile_context>
chip_gen: v7x
topology: tpu7x:2x2x1
jax: 0.10.0
libtpu: 0.0.40
codegen_flags: <defaults>
</compile_context>

<pallas_src>
import functools

import jax
import jax.numpy as jnp
from jax.experimental import pallas as pl
from jax.experimental.pallas import tpu as pltpu

EPS = 1e-5


def _round_up(v, m):
    return (v + m - 1) // m * m


def _convblock_kernel(x_ref, w_ref, gb_ref, o_ref,
                      patch_ref, sum_ref, sq_ref,
                      *, num_images, cin, khs, kws, wp, oh, ow, eps):
    """One grid step == one image.

    x_ref:     [1, Cin, L_in]     zero-padded image, channel-major, flat spatial axis
    w_ref:     [Cout, Kpad]       conv weight, tap-major columns, MXU dtype, zero-padded K
    gb_ref:    [Cout, 2]          (gamma, beta)
    o_ref:     [N, Cout, L_out]   VMEM-resident output block (un-normalized until the end)
    patch_ref: [Kpad, L_out]      VMEM staging buffer for the fused im2col
    sum_ref / sq_ref: [Cout, 1]   cross-step BN sum / sum-of-squares accumulators
    """
    n = pl.program_id(0)
    l_out = patch_ref.shape[1]

    @pl.when(n == 0)
    def _init():
        # Zero the whole staging buffer once so the K-padding rows
        # (rows >= Cin*KH*KW) contribute exactly 0 to every matmul.
        patch_ref[...] = jnp.zeros_like(patch_ref)
        sum_ref[...] = jnp.zeros_like(sum_ref)
        sq_ref[...] = jnp.zeros_like(sq_ref)

    # ReLU once, cast to the MXU dtype once (zero spatial padding is ReLU-invariant,
    # so relu(pad(x)) == pad(relu(x))).
    xr = jnp.maximum(x_ref[0], 0.0).astype(patch_ref.dtype)        # [Cin, L_in]

    # Fused im2col, entirely in VMEM: tap (dh, dw) of a stride-1 conv on the
    # padded, row-major-flattened image is a flat shift by dh*Wp + dw.
    for t in range(khs * kws):
        dh, dw = divmod(t, kws)
        off = dh * wp + dw
        patch_ref[t * cin:(t + 1) * cin, :] = xr[:, off:off + l_out]

    # Conv2d == one MXU matmul, f32 accumulation.  (Conv bias omitted: the
    # training-mode BN mean subtraction cancels it exactly.)
    y = jnp.dot(w_ref[...], patch_ref[...],
                preferred_element_type=jnp.float32)                # [Cout, L_out]

    # Stash the un-normalized conv output for this image (lane-dense store);
    # the resident output block is normalized in place on the last step.
    o_ref[n] = y.astype(o_ref.dtype)

    # One-pass BN statistics, masking the width-pad / tail garbage columns.
    col = jax.lax.broadcasted_iota(jnp.int32, (1, l_out), 1)
    valid = (col % wp < ow) & (col < oh * wp)
    yv = jnp.where(valid, y, 0.0)
    sum_ref[...] += jnp.sum(yv, axis=1, keepdims=True)
    sq_ref[...] += jnp.sum(yv * yv, axis=1, keepdims=True)

    @pl.when(n == num_images - 1)
    def _finalize():
        cnt = jnp.float32(num_images * oh * ow)
        mean = sum_ref[...] / cnt                                  # [Cout, 1]
        var = sq_ref[...] / cnt - mean * mean                      # biased var (PyTorch train mode)
        scale = gb_ref[:, 0:1] * jax.lax.rsqrt(var + eps)          # gamma * rsqrt(var+eps)
        shift = gb_ref[:, 1:2] - mean * scale                      # beta  - mean*scale
        for i in range(num_images):                                # one FMA per output element
            yi = o_ref[i].astype(jnp.float32)
            o_ref[i] = (yi * scale + shift).astype(o_ref.dtype)


def conv_block(x, w, b, gamma, beta, *, stride=1, padding=1,
               mxu_dtype=jnp.bfloat16, eps=EPS):
    """ReLU -> Conv2d(stride=1, bias) -> BatchNorm2d (training-mode batch stats).

    x: [N, Cin, H, W] (NCHW, PyTorch layout), w: [Cout, Cin, KH, KW],
    b/gamma/beta: [Cout].  Returns NCHW [N, Cout, OH, OW].
    """
    if stride != 1:
        raise NotImplementedError("flat-shift conv kernel assumes stride == 1")
    del b  # Per-channel conv bias is cancelled exactly by BN's mean subtraction.

    N, Cin, H, W = x.shape
    Cout, _, KH, KW = w.shape
    p = padding
    Hp, Wp = H + 2 * p, W + 2 * p
    OH = Hp - KH + 1
    OW = Wp - KW + 1

    # Kernel works on lane-dense, 128-aligned flattened rows.
    L_out = _round_up(OH * Wp, 128)                  # output columns computed per image
    max_off = (KH - 1) * Wp + (KW - 1)               # largest flat tap shift
    L_in = _round_up(max(Hp * Wp, max_off + L_out), 128)
    Kdim = Cin * KH * KW
    Kpad = _round_up(Kdim, 16)                       # aligned contraction dim

    # --- cheap XLA glue: pads/reshapes only, no transposes, no im2col in HBM ---
    xp = jnp.pad(x, ((0, 0), (0, 0), (p, p), (p, p)))            # [N, Cin, Hp, Wp]
    xflat = xp.reshape(N, Cin, Hp * Wp)
    xflat = jnp.pad(xflat, ((0, 0), (0, 0), (0, L_in - Hp * Wp)))  # [N, Cin, L_in]

    # Weight [Cout, Cin, KH, KW] -> [Cout, (kh, kw, cin)] matching the patch rows,
    # zero-padded to Kpad, MXU dtype.
    Wm = w.transpose(0, 2, 3, 1).reshape(Cout, Kdim)
    Wm = jnp.pad(Wm, ((0, 0), (0, Kpad - Kdim))).astype(mxu_dtype)
    gb = jnp.stack([gamma, beta], axis=1).astype(jnp.float32)     # [Cout, 2]

    kernel = functools.partial(
        _convblock_kernel,
        num_images=N, cin=Cin, khs=KH, kws=KW, wp=Wp, oh=OH, ow=OW, eps=eps)

    out = pl.pallas_call(
        kernel,
        out_shape=jax.ShapeDtypeStruct((N, Cout, L_out), x.dtype),
        grid_spec=pltpu.PrefetchScalarGridSpec(
            num_scalar_prefetch=0,
            grid=(N,),
            in_specs=[
                pl.BlockSpec((1, Cin, L_in), lambda n: (n, 0, 0)),   # per-image block
                pl.BlockSpec((Cout, Kpad), lambda n: (0, 0)),        # weights (resident)
                pl.BlockSpec((Cout, 2), lambda n: (0, 0)),           # gamma/beta (one DMA)
            ],
            out_specs=pl.BlockSpec((N, Cout, L_out), lambda n: (0, 0, 0)),
            scratch_shapes=[
                pltpu.VMEM((Kpad, L_out), mxu_dtype),   # fused-im2col staging buffer
                pltpu.VMEM((Cout, 1), jnp.float32),     # BN sum accumulator
                pltpu.VMEM((Cout, 1), jnp.float32),     # BN sum-of-squares accumulator
            ],
        ),
        # Batch axis carries the BN accumulators + resident output block -> sequential.
        # For large shapes: split into a stats pass and a normalize pass to allow
        # "parallel" spatial tiling across v7x's two TensorCores.
        compiler_params=pltpu.CompilerParams(dimension_semantics=("arbitrary",)),
    )(xflat, Wm, gb)

    # [N, Cout, L_out] -> drop tail + width-pad columns -> NCHW, no transpose needed.
    return out[:, :, :OH * Wp].reshape(N, Cout, OH, Wp)[:, :, :, :OW]


def conv_block_reference(x, w, b, gamma, beta, *, padding=1,
                         mxu_dtype=jnp.bfloat16, eps=EPS):
    """Plain-JAX reference (same MXU-dtype cast, keeps the conv bias)."""
    xr = jnp.maximum(x, 0.0).astype(mxu_dtype)
    y = jax.lax.conv_general_dilated(
        xr, w.astype(mxu_dtype), window_strides=(1, 1),
        padding=[(padding, padding), (padding, padding)],
        dimension_numbers=("NCHW", "OIHW", "NCHW"),
        preferred_element_type=jnp.float32,
    ) + b.reshape(1, -1, 1, 1)
    mean = jnp.mean(y, axis=(0, 2, 3), keepdims=True)
    var = jnp.mean(jnp.square(y - mean), axis=(0, 2, 3), keepdims=True)
    y_hat = (y - mean) * jax.lax.rsqrt(var + eps)
    out = gamma.reshape(1, -1, 1, 1) * y_hat + beta.reshape(1, -1, 1, 1)
    return out.astype(x.dtype)


if __name__ == "__main__":
    # ConvBlock(in_channels=4, out_channels=8, kernel_size=3, padding=1)
    # applied to a [2, 4, 16, 16] NCHW input.
    N, Cin, H, W = 2, 4, 16, 16
    Cout, KH, KW = 8, 3, 3
    padding = 1

    key = jax.random.PRNGKey(0)
    kx, kw_, kb = jax.random.split(key, 3)
    x = jax.random.normal(kx, (N, Cin, H, W), dtype=jnp.float32)
    w = 0.1 * jax.random.normal(kw_, (Cout, Cin, KH, KW), dtype=jnp.float32)
    b = 0.1 * jax.random.normal(kb, (Cout,), dtype=jnp.float32)   # cancelled by BN
    gamma = jnp.ones((Cout,), dtype=jnp.float32)                  # BatchNorm2d weight init
    beta = jnp.zeros((Cout,), dtype=jnp.float32)                  # BatchNorm2d bias init

    out = conv_block(x, w, b, gamma, beta, stride=1, padding=padding)
    out = jax.block_until_ready(out)

    ref = conv_block_reference(x, w, b, gamma, beta, padding=padding)
    assert out.shape == (N, Cout, H, W), out.shape
    # Both sides use identical bf16 MXU operands and f32 accumulation; the only
    # differences are summation order, one-pass vs two-pass variance, and the
    # exact (analytically zero) bias cancellation -> comfortably within 1e-3.
    assert jnp.allclose(out, ref, atol=1e-3, rtol=1e-3), float(jnp.max(jnp.abs(out - ref)))

    print("KERNEL_OK")
</pallas_src>

<mosaic_0001>
module attributes {stable_mosaic.version = 11 : i64} {
  func.func @_convblock_kernel(%arg0: i32, %arg1: memref<1x4x512xf32, #tpu.memory_space<vmem>>, %arg2: memref<8x48xbf16, #tpu.memory_space<vmem>>, %arg3: memref<8x2xf32, #tpu.memory_space<vmem>>, %arg4: memref<2x8x384xf32, #tpu.memory_space<vmem>>, %arg5: memref<48x384xbf16, #tpu.memory_space<vmem>>, %arg6: memref<8x1xf32, #tpu.memory_space<vmem>>, %arg7: memref<8x1xf32, #tpu.memory_space<vmem>>) attributes {dimension_semantics = [#tpu.dimension_semantics<arbitrary>], iteration_bounds = array<i64: 2>, scalar_prefetch = 0 : i64, scratch_operands = 3 : i64, tpu.core_type = #tpu.core_type<tc>, window_params = [{transform_indices = @transform_0, window_bounds = array<i64: 1, 4, 512>}, {pipeline_mode = #tpu.pipeline_mode<synchronous>, transform_indices = @transform_1, window_bounds = array<i64: 8, 48>}, {pipeline_mode = #tpu.pipeline_mode<synchronous>, transform_indices = @transform_2, window_bounds = array<i64: 8, 2>}, {pipeline_mode = #tpu.pipeline_mode<synchronous>, transform_indices = @transform_3, window_bounds = array<i64: 2, 8, 384>}]} {
    %c0_i32 = arith.constant 0 : i32
    %0 = arith.cmpi eq, %arg0, %c0_i32 : i32
    %1 = arith.extui %0 : i1 to i32
    %c0_i32_0 = arith.constant 0 : i32
    %2 = arith.cmpi ne, %1, %c0_i32_0 : i32
    scf.if %2 {
      %cst_37 = arith.constant 0.000000e+00 : bf16
      %73 = vector.broadcast %cst_37 : bf16 to vector<48x384xbf16>
      %c0_38 = arith.constant 0 : index
      %c0_39 = arith.constant 0 : index
      %74 = vector.load %arg5[%c0_38, %c0_39] : memref<48x384xbf16, #tpu.memory_space<vmem>>, vector<48x384xbf16>
      tpu.vector_store %arg5[%c0_38, %c0_39], %73 {strides = array<i32>} : memref<48x384xbf16, #tpu.memory_space<vmem>>, vector<48x384xbf16>,
      %cst_40 = arith.constant 0.000000e+00 : f32
      %75 = vector.broadcast %cst_40 : f32 to vector<8x1xf32>
      %c0_41 = arith.constant 0 : index
      %c0_42 = arith.constant 0 : index
      %76 = vector.load %arg6[%c0_41, %c0_42] : memref<8x1xf32, #tpu.memory_space<vmem>>, vector<8x1xf32>
      tpu.vector_store %arg6[%c0_41, %c0_42], %75 {strides = array<i32>} : memref<8x1xf32, #tpu.memory_space<vmem>>, vector<8x1xf32>,
      %cst_43 = arith.constant 0.000000e+00 : f32
      %77 = vector.broadcast %cst_43 : f32 to vector<8x1xf32>
      %c0_44 = arith.constant 0 : index
      %c0_45 = arith.constant 0 : index
      %78 = vector.load %arg7[%c0_44, %c0_45] : memref<8x1xf32, #tpu.memory_space<vmem>>, vector<8x1xf32>
      tpu.vector_store %arg7[%c0_44, %c0_45], %77 {strides = array<i32>} : memref<8x1xf32, #tpu.memory_space<vmem>>, vector<8x1xf32>,
    } else {
    }
    %c0 = arith.constant 0 : index
    %c0_1 = arith.constant 0 : index
    %c0_2 = arith.constant 0 : index
    %3 = vector.load %arg1[%c0, %c0_1, %c0_2] : memref<1x4x512xf32, #tpu.memory_space<vmem>>, vector<1x4x512xf32>
    %4 = vector.shape_cast %3 : vector<1x4x512xf32> to vector<4x512xf32>
    %cst = arith.constant 0.000000e+00 : f32
    %5 = vector.broadcast %cst : f32 to vector<4x512xf32>
    %6 = arith.maximumf %4, %5 : vector<4x512xf32>
    %7 = arith.truncf %6 : vector<4x512xf32> to vector<4x512xbf16>
    %8 = vector.extract_strided_slice %7 {offsets = [0, 0], sizes = [4, 384], strides = [1, 1]} : vector<4x512xbf16> to vector<4x384xbf16>
    %c0_3 = arith.constant 0 : index
    %c0_4 = arith.constant 0 : index
    %9 = vector.load %arg5[%c0_3, %c0_4] : memref<48x384xbf16, #tpu.memory_space<vmem>>, vector<4x384xbf16>
    tpu.vector_store %arg5[%c0_3, %c0_4], %8 {strides = array<i32>} : memref<48x384xbf16, #tpu.memory_space<vmem>>, vector<4x384xbf16>,
    %10 = vector.extract_strided_slice %7 {offsets = [0, 1], sizes = [4, 384], strides = [1, 1]} : vector<4x512xbf16> to vector<4x384xbf16>
    %c4 = arith.constant 4 : index
    %c0_5 = arith.constant 0 : index
    %11 = vector.load %arg5[%c4, %c0_5] : memref<48x384xbf16, #tpu.memory_space<vmem>>, vector<4x384xbf16>
    tpu.vector_store %arg5[%c4, %c0_5], %10 {strides = array<i32>} : memref<48x384xbf16, #tpu.memory_space<vmem>>, vector<4x384xbf16>,
    %12 = vector.extract_strided_slice %7 {offsets = [0, 2], sizes = [4, 384], strides = [1, 1]} : vector<4x512xbf16> to vector<4x384xbf16>
    %c8 = arith.constant 8 : index
    %c0_6 = arith.constant 0 : index
    %13 = vector.load %arg5[%c8, %c0_6] : memref<48x384xbf16, #tpu.memory_space<vmem>>, vector<4x384xbf16>
    tpu.vector_store %arg5[%c8, %c0_6], %12 {strides = array<i32>} : memref<48x384xbf16, #tpu.memory_space<vmem>>, vector<4x384xbf16>,
    %14 = vector.extract_strided_slice %7 {offsets = [0, 18], sizes = [4, 384], strides = [1, 1]} : vector<4x512xbf16> to vector<4x384xbf16>
    %c12 = arith.constant 12 : index
    %c0_7 = arith.constant 0 : index
    %15 = vector.load %arg5[%c12, %c0_7] : memref<48x384xbf16, #tpu.memory_space<vmem>>, vector<4x384xbf16>
    tpu.vector_store %arg5[%c12, %c0_7], %14 {strides = array<i32>} : memref<48x384xbf16, #tpu.memory_space<vmem>>, vector<4x384xbf16>,
    %16 = vector.extract_strided_slice %7 {offsets = [0, 19], sizes = [4, 384], strides = [1, 1]} : vector<4x512xbf16> to vector<4x384xbf16>
    %c16 = arith.constant 16 : index
    %c0_8 = arith.constant 0 : index
    %17 = vector.load %arg5[%c16, %c0_8] : memref<48x384xbf16, #tpu.memory_space<vmem>>, vector<4x384xbf16>
    tpu.vector_store %arg5[%c16, %c0_8], %16 {strides = array<i32>} : memref<48x384xbf16, #tpu.memory_space<vmem>>, vector<4x384xbf16>,
    %18 = vector.extract_strided_slice %7 {offsets = [0, 20], sizes = [4, 384], strides = [1, 1]} : vector<4x512xbf16> to vector<4x384xbf16>
    %c20 = arith.constant 20 : index
    %c0_9 = arith.constant 0 : index
    %19 = vector.load %arg5[%c20, %c0_9] : memref<48x384xbf16, #tpu.memory_space<vmem>>, vector<4x384xbf16>
    tpu.vector_store %arg5[%c20, %c0_9], %18 {strides = array<i32>} : memref<48x384xbf16, #tpu.memory_space<vmem>>, vector<4x384xbf16>,
    %20 = vector.extract_strided_slice %7 {offsets = [0, 36], sizes = [4, 384], strides = [1, 1]} : vector<4x512xbf16> to vector<4x384xbf16>
    %c24 = arith.constant 24 : index
    %c0_10 = arith.constant 0 : index
    %21 = vector.load %arg5[%c24, %c0_10] : memref<48x384xbf16, #tpu.memory_space<vmem>>, vector<4x384xbf16>
    tpu.vector_store %arg5[%c24, %c0_10], %20 {strides = array<i32>} : memref<48x384xbf16, #tpu.memory_space<vmem>>, vector<4x384xbf16>,
    %22 = vector.extract_strided_slice %7 {offsets = [0, 37], sizes = [4, 384], strides = [1, 1]} : vector<4x512xbf16> to vector<4x384xbf16>
    %c28 = arith.constant 28 : index
    %c0_11 = arith.constant 0 : index
    %23 = vector.load %arg5[%c28, %c0_11] : memref<48x384xbf16, #tpu.memory_space<vmem>>, vector<4x384xbf16>
    tpu.vector_store %arg5[%c28, %c0_11], %22 {strides = array<i32>} : memref<48x384xbf16, #tpu.memory_space<vmem>>, vector<4x384xbf16>,
    %24 = vector.extract_strided_slice %7 {offsets = [0, 38], sizes = [4, 384], strides = [1, 1]} : vector<4x512xbf16> to vector<4x384xbf16>
    %c32 = arith.constant 32 : index
    %c0_12 = arith.constant 0 : index
    %25 = vector.load %arg5[%c32, %c0_12] : memref<48x384xbf16, #tpu.memory_space<vmem>>, vector<4x384xbf16>
    tpu.vector_store %arg5[%c32, %c0_12], %24 {strides = array<i32>} : memref<48x384xbf16, #tpu.memory_space<vmem>>, vector<4x384xbf16>,
    %c0_13 = arith.constant 0 : index
    %c0_14 = arith.constant 0 : index
    %26 = vector.load %arg2[%c0_13, %c0_14] : memref<8x48xbf16, #tpu.memory_space<vmem>>, vector<8x48xbf16>
    %c0_15 = arith.constant 0 : index
    %c0_16 = arith.constant 0 : index
    %27 = vector.load %arg5[%c0_15, %c0_16] : memref<48x384xbf16, #tpu.memory_space<vmem>>, vector<48x384xbf16>
    %cst_17 = arith.constant dense<0.000000e+00> : vector<8x384xf32>
    %28 = tpu.matmul %26, %27, %cst_17 {dimension_numbers = #tpu.dot_dimension_numbers<[1], [0], [0], [1], [0, 0, 1, 1], [], []>} : vector<8x48xbf16>, vector<48x384xbf16>, vector<8x384xf32> -> vector<8x384xf32>
    %29 = arith.index_cast %arg0 : i32 to index
    %c0_18 = arith.constant 0 : index
    %c0_19 = arith.constant 0 : index
    %30 = vector.load %arg4[%29, %c0_18, %c0_19] : memref<2x8x384xf32, #tpu.memory_space<vmem>>, vector<1x8x384xf32>
    %31 = vector.shape_cast %30 : vector<1x8x384xf32> to vector<8x384xf32>
    %32 = vector.shape_cast %28 : vector<8x384xf32> to vector<1x8x384xf32>
    tpu.vector_store %arg4[%29, %c0_18, %c0_19], %32 {strides = array<i32>} : memref<2x8x384xf32, #tpu.memory_space<vmem>>, vector<1x8x384xf32>,
    %33 = tpu.iota {dimensions = array<i32: 1>} : vector<1x384xi32>
    %c18_i32 = arith.constant 18 : i32
    %c0_i32_20 = arith.constant 0 : i32
    %34 = arith.cmpi eq, %c18_i32, %c0_i32_20 : i32
    %c1_i32 = arith.constant 1 : i32
    %35 = arith.select %34, %c1_i32, %c18_i32 : i32
    %36 = vector.broadcast %35 : i32 to vector<1x384xi32>
    %37 = arith.remsi %33, %36 : vector<1x384xi32>
    %c0_i32_21 = arith.constant 0 : i32
    %38 = vector.broadcast %c0_i32_21 : i32 to vector<1x384xi32>
    %39 = arith.cmpi ne, %37, %38 : vector<1x384xi32>
    %c0_i32_22 = arith.constant 0 : i32
    %40 = vector.broadcast %c0_i32_22 : i32 to vector<1x384xi32>
    %41 = arith.cmpi slt, %37, %40 : vector<1x384xi32>
    %c0_i32_23 = arith.constant 0 : i32
    %42 = arith.cmpi slt, %35, %c0_i32_23 : i32
    %43 = vector.broadcast %42 : i1 to vector<1x384xi1>
    %44 = vector.broadcast %43 : vector<1x384xi1> to vector<1x384xi1>
    %45 = arith.xori %41, %44 : vector<1x384xi1>
    %46 = arith.andi %45, %39 : vector<1x384xi1>
    %47 = vector.broadcast %35 : i32 to vector<1x384xi32>
    %48 = arith.addi %37, %47 : vector<1x384xi32>
    %49 = arith.select %46, %48, %37 : vector<1x384xi1>, vector<1x384xi32>
    %c16_i32 = arith.constant 16 : i32
    %50 = vector.broadcast %c16_i32 : i32 to vector<1x384xi32>
    %51 = arith.cmpi slt, %49, %50 : vector<1x384xi32>
    %c288_i32 = arith.constant 288 : i32
    %52 = vector.broadcast %c288_i32 : i32 to vector<1x384xi32>
    %53 = arith.cmpi slt, %33, %52 : vector<1x384xi32>
    %54 = arith.andi %51, %53 : vector<1x384xi1>
    %cst_24 = arith.constant 0.000000e+00 : f32
    %55 = vector.shape_cast %54 : vector<1x384xi1> to vector<1x384xi1>
    %56 = vector.broadcast %55 : vector<1x384xi1> to vector<8x384xi1>
    %57 = vector.broadcast %cst_24 : f32 to vector<8x384xf32>
    %58 = arith.select %56, %28, %57 : vector<8x384xi1>, vector<8x384xf32>
    %c0_25 = arith.constant 0 : index
    %c0_26 = arith.constant 0 : index
    %59 = vector.load %arg6[%c0_25, %c0_26] : memref<8x1xf32, #tpu.memory_space<vmem>>, vector<8x1xf32>
    %cst_27 = arith.constant dense<0.000000e+00> : vector<8xf32>
    %60 = vector.multi_reduction <add>, %58, %cst_27 [1] : vector<8x384xf32> to vector<8xf32>
    %61 = vector.shape_cast %60 : vector<8xf32> to vector<8x1xf32>
    %62 = arith.addf %59, %61 : vector<8x1xf32>
    %c0_28 = arith.constant 0 : index
    %c0_29 = arith.constant 0 : index
    %63 = vector.load %arg6[%c0_28, %c0_29] : memref<8x1xf32, #tpu.memory_space<vmem>>, vector<8x1xf32>
    tpu.vector_store %arg6[%c0_28, %c0_29], %62 {strides = array<i32>} : memref<8x1xf32, #tpu.memory_space<vmem>>, vector<8x1xf32>,
    %c0_30 = arith.constant 0 : index
    %c0_31 = arith.constant 0 : index
    %64 = vector.load %arg7[%c0_30, %c0_31] : memref<8x1xf32, #tpu.memory_space<vmem>>, vector<8x1xf32>
    %65 = arith.mulf %58, %58 : vector<8x384xf32>
    %cst_32 = arith.constant dense<0.000000e+00> : vector<8xf32>
    %66 = vector.multi_reduction <add>, %65, %cst_32 [1] : vector<8x384xf32> to vector<8xf32>
    %67 = vector.shape_cast %66 : vector<8xf32> to vector<8x1xf32>
    %68 = arith.addf %64, %67 : vector<8x1xf32>
    %c0_33 = arith.constant 0 : index
    %c0_34 = arith.constant 0 : index
    %69 = vector.load %arg7[%c0_33, %c0_34] : memref<8x1xf32, #tpu.memory_space<vmem>>, vector<8x1xf32>
    tpu.vector_store %arg7[%c0_33, %c0_34], %68 {strides = array<i32>} : memref<8x1xf32, #tpu.memory_space<vmem>>, vector<8x1xf32>,
    %c1_i32_35 = arith.constant 1 : i32
    %70 = arith.cmpi eq, %arg0, %c1_i32_35 : i32
    %71 = arith.extui %70 : i1 to i32
    %c0_i32_36 = arith.constant 0 : i32
    %72 = arith.cmpi ne, %71, %c0_i32_36 : i32
    scf.if %72 {
      %c0_37 = arith.constant 0 : index
      %c0_38 = arith.constant 0 : index
      %73 = vector.load %arg6[%c0_37, %c0_38] : memref<8x1xf32, #tpu.memory_space<vmem>>, vector<8x1xf32>
      %cst_39 = arith.constant 5.120000e+02 : f32
      %74 = vector.broadcast %cst_39 : f32 to vector<8x1xf32>
      %75 = arith.divf %73, %74 : vector<8x1xf32>
      %c0_40 = arith.constant 0 : index
      %c0_41 = arith.constant 0 : index
      %76 = vector.load %arg7[%c0_40, %c0_41] : memref<8x1xf32, #tpu.memory_space<vmem>>, vector<8x1xf32>
      %cst_42 = arith.constant 5.120000e+02 : f32
      %77 = vector.broadcast %cst_42 : f32 to vector<8x1xf32>
      %78 = arith.divf %76, %77 : vector<8x1xf32>
      %79 = arith.mulf %75, %75 : vector<8x1xf32>
      %80 = arith.subf %78, %79 : vector<8x1xf32>
      %c0_43 = arith.constant 0 : index
      %c0_44 = arith.constant 0 : index
      %81 = vector.load %arg3[%c0_43, %c0_44] : memref<8x2xf32, #tpu.memory_space<vmem>>, vector<8x1xf32>
      %cst_45 = arith.constant 9.99999974E-6 : f32
      %82 = vector.broadcast %cst_45 : f32 to vector<8x1xf32>
      %83 = arith.addf %80, %82 : vector<8x1xf32>
      %84 = math.rsqrt %83 : vector<8x1xf32>
      %85 = arith.mulf %81, %84 : vector<8x1xf32>
      %c0_46 = arith.constant 0 : index
      %c1 = arith.constant 1 : index
      %86 = vector.load %arg3[%c0_46, %c1] : memref<8x2xf32, #tpu.memory_space<vmem>>, vector<8x1xf32>
      %87 = arith.mulf %75, %85 : vector<8x1xf32>
      %88 = arith.subf %86, %87 : vector<8x1xf32>
      %c0_47 = arith.constant 0 : index
      %c0_48 = arith.constant 0 : index
      %c0_49 = arith.constant 0 : index
      %89 = vector.load %arg4[%c0_47, %c0_48, %c0_49] : memref<2x8x384xf32, #tpu.memory_space<vmem>>, vector<1x8x384xf32>
      %90 = vector.shape_cast %89 : vector<1x8x384xf32> to vector<8x384xf32>
      %91 = vector.broadcast %85 : vector<8x1xf32> to vector<8x384xf32>
      %92 = arith.mulf %90, %91 : vector<8x384xf32>
      %93 = vector.broadcast %88 : vector<8x1xf32> to vector<8x384xf32>
      %94 = arith.addf %92, %93 : vector<8x384xf32>
      %c0_50 = arith.constant 0 : index
      %c0_51 = arith.constant 0 : index
      %c0_52 = arith.constant 0 : index
      %95 = vector.load %arg4[%c0_50, %c0_51, %c0_52] : memref<2x8x384xf32, #tpu.memory_space<vmem>>, vector<1x8x384xf32>
      %96 = vector.shape_cast %95 : vector<1x8x384xf32> to vector<8x384xf32>
      %97 = vector.shape_cast %94 : vector<8x384xf32> to vector<1x8x384xf32>
      tpu.vector_store %arg4[%c0_50, %c0_51, %c0_52], %97 {strides = array<i32>} : memref<2x8x384xf32, #tpu.memory_space<vmem>>, vector<1x8x384xf32>,
      %c1_53 = arith.constant 1 : index
      %c0_54 = arith.constant 0 : index
      %c0_55 = arith.constant 0 : index
      %98 = vector.load %arg4[%c1_53, %c0_54, %c0_55] : memref<2x8x384xf32, #tpu.memory_space<vmem>>, vector<1x8x384xf32>
      %99 = vector.shape_cast %98 : vector<1x8x384xf32> to vector<8x384xf32>
      %100 = vector.broadcast %85 : vector<8x1xf32> to vector<8x384xf32>
      %101 = arith.mulf %99, %100 : vector<8x384xf32>
      %102 = vector.broadcast %88 : vector<8x1xf32> to vector<8x384xf32>
      %103 = arith.addf %101, %102 : vector<8x384xf32>
      %c1_56 = arith.constant 1 : index
      %c0_57 = arith.constant 0 : index
      %c0_58 = arith.constant 0 : index
      %104 = vector.load %arg4[%c1_56, %c0_57, %c0_58] : memref<2x8x384xf32, #tpu.memory_space<vmem>>, vector<1x8x384xf32>
      %105 = vector.shape_cast %104 : vector<1x8x384xf32> to vector<8x384xf32>
      %106 = vector.shape_cast %103 : vector<8x384xf32> to vector<1x8x384xf32>
      tpu.vector_store %arg4[%c1_56, %c0_57, %c0_58], %106 {strides = array<i32>} : memref<2x8x384xf32, #tpu.memory_space<vmem>>, vector<1x8x384xf32>,
    } else {
    }
    return
  }
  func.func @transform_0(%arg0: i32) -> (i32, i32, i32) {
    %c0_i32 = arith.constant 0 : i32
    %c0_i32_0 = arith.constant 0 : i32
    %c0_i32_1 = arith.constant 0 : i32
    return %arg0, %c0_i32, %c0_i32_0 : i32, i32, i32
  }
  func.func @transform_1(%arg0: i32) -> (i32, i32) {
    %c0_i32 = arith.constant 0 : i32
    %c0_i32_0 = arith.constant 0 : i32
    %c0_i32_1 = arith.constant 0 : i32
    return %c0_i32, %c0_i32_0 : i32, i32
  }
  func.func @transform_2(%arg0: i32) -> (i32, i32) {
    %c0_i32 = arith.constant 0 : i32
    %c0_i32_0 = arith.constant 0 : i32
    %c0_i32_1 = arith.constant 0 : i32
    return %c0_i32, %c0_i32_0 : i32, i32
  }
  func.func @transform_3(%arg0: i32) -> (i32, i32, i32) {
    %c0_i32 = arith.constant 0 : i32
    %c0_i32_0 = arith.constant 0 : i32
    %c0_i32_1 = arith.constant 0 : i32
    %c0_i32_2 = arith.constant 0 : i32
    return %c0_i32, %c0_i32_0, %c0_i32_1 : i32, i32, i32
  }
}

</mosaic_0001>

<llo_original>
// kernel: tpu_custom_call.1
$region0: #{tpu_custom_call.1}
  #allocation0 [shape = 'u32[]', space=smem, size = 0x4, offset = 0x4, fixed_abs, tag = 'smem constant byte address 0x4 - core index']
  #allocation1 [shape = 'u32[144,128]{1,0:T(1,128)}', space=vmem, size = 0x12000, scoped, tag = 'internal scratch']
  #allocation2 [shape = 'bf16[48,384]{1,0:T(16,128)(2,1)}', space=vmem, size = 0x9000, scoped, tag = 'scratch operand']
  #allocation3 [shape = 'f32[8,1]{1,0:T(8,128)}', space=vmem, size = 0x1000, scoped, tag = 'scratch operand']
  #allocation4 [shape = 'f32[8,1]{1,0:T(8,128)}', space=vmem, size = 0x1000, scoped, tag = 'scratch operand']
  %s0 = inlined_call_operand.hbm [shape: f32[2,4,512], index: 0, kind: input, shape index: {}]
  %s1 = inlined_call_operand.vmem [shape: bf16[8,48], index: 1, kind: input, shape index: {}]
  %s2 = inlined_call_operand.vmem [shape: f32[8,2], index: 2, kind: input, shape index: {}]
  %s3 = inlined_call_operand.hbm [shape: f32[2,8,384], index: 3, kind: output, shape index: {}]
  %s4 = sld [smem:[#allocation0]]
  $region57: #{tpu_custom_call.1} parent=0
    _
  %s6 = ssub.s32 1, %s4
  %s7 = scalar_select 0, %s6, %s4
  $region1: #{tpu_custom_call.1} parent=0
    #allocation5 [shape = 'u8[16384]{0}', space=vmem, size = 0x4000, scoped, tag = 'input window, operand 0']
    #allocation6 [shape = 's32[2]{0}', space=sflag, size = 0x8, scoped, tag = 'scoped memory for tpu_custom_call.1']
    #allocation7 [shape = 's32[2]{0}', space=sflag, size = 0x8, scoped, tag = 'scoped memory for tpu_custom_call.1']
    #allocation8 [shape = 'u8[24576]{0}', space=vmem, size = 0x6000, scoped, tag = 'output window, operand 0, single buffered']
    %8 = vsyncpa [#allocation6], 0
    %s9 = scalar_lea.sflag [#allocation6], 1
    %10 = vsyncpa %s9, 0
    %11 = vsyncpa [#allocation7], 0
    loop: start=0, step=1, limit=4
    $region2: #{tpu_custom_call.1} parent=1 // loop_pre_header
      _
    $region3: #{tpu_custom_call.1} parent=1 // loop_header
      %s13 = sphi 0, %s17
      %p14 = scmp.ge.s32.totalorder %s13, 4
      %s23 = sphi 0, %s25
      %s26 = sphi 0, %s23
      %s27 = sphi 0, %s26
      %s43 = sphi 0, %s27
      %s47 = sphi 0, %s47
      %s49 = sphi 0, %s47
      %s50 = sphi 0, %s49
      %s64 = sphi 0, %s50
      %s68 = sphi 0, %s68
      %s70 = sphi 0, %s68
      %s71 = sphi 0, %s70
      %s85 = sphi 0, %s71
      %s89 = sphi 0, %s89
      %s91 = sphi 0, %s89
      %s92 = sphi 0, %s91
      %s106 = sphi 0, %s92
    $region4: #{tpu_custom_call.1} parent=1 // loop_header_branch
      %16 = sbr.rel (%p14) target = $region8
    $region5: #{tpu_custom_call.1} parent=1 // loop_body
      %s18 = ssub.s32 %s13, 1
      %s19 = ssub.s32 %s13, 2
      %s20 = sadd.s32 %s13, 1
      %s21 = ssub.s32 %s13, %s20
      %p22 = scmp.eq.s32.totalorder %s21, 0
      %s24 = sadd.s32 %s23, 1
      %s25 = scalar_select %p22, %s23, %s24
      %p28 = pneg %p22
      %p29 = scmp.eq.s32.totalorder %s13, 1
      %p30 = por %p28, %p29
      %p31 = scmp.ne.s32.totalorder %s23, %s26
      %p32 = scmp.eq.s32.totalorder %s13, 0
      %p33 = por %p31, %p32
      %p34 = scmp.ne.s32.totalorder %s23, %s26
      %p35 = scmp.eq.s32.totalorder %s18, 1
      %p36 = por %p34, %p35
      %p37 = scmp.ne.s32.totalorder %s26, %s27
      %p38 = scmp.eq.s32.totalorder %s18, 0
      %p39 = por %p37, %p38
      %p40 = scmp.ne.s32.totalorder %s26, %s27
      %p41 = scmp.eq.s32.totalorder %s19, 1
      %p42 = por %p40, %p41
      %p44 = scmp.ne.s32.totalorder %s27, %s43
      %p45 = scmp.eq.s32.totalorder %s19, 0
      %p46 = por %p44, %p45
      %s48 = sadd.s32 %s47, 1
      %p51 = scmp.eq.s32.totalorder %s13, 1
      %p52 = scmp.ne.s32.totalorder %s47, %s49
      %p53 = scmp.eq.s32.totalorder %s13, 0
      %p54 = por %p52, %p53
      %p55 = scmp.ne.s32.totalorder %s47, %s49
      %p56 = scmp.eq.s32.totalorder %s18, 1
      %p57 = por %p55, %p56
      %p58 = scmp.ne.s32.totalorder %s49, %s50
      %p59 = scmp.eq.s32.totalorder %s18, 0
      %p60 = por %p58, %p59
      %p61 = scmp.ne.s32.totalorder %s49, %s50
      %p62 = scmp.eq.s32.totalorder %s19, 1
      %p63 = por %p61, %p62
      %p65 = scmp.ne.s32.totalorder %s50, %s64
      %p66 = scmp.eq.s32.totalorder %s19, 0
      %p67 = por %p65, %p66
      %s69 = sadd.s32 %s68, 1
      %p72 = scmp.eq.s32.totalorder %s13, 1
      %p73 = scmp.ne.s32.totalorder %s68, %s70
      %p74 = scmp.eq.s32.totalorder %s13, 0
      %p75 = por %p73, %p74
      %p76 = scmp.ne.s32.totalorder %s68, %s70
      %p77 = scmp.eq.s32.totalorder %s18, 1
      %p78 = por %p76, %p77
      %p79 = scmp.ne.s32.totalorder %s70, %s71
      %p80 = scmp.eq.s32.totalorder %s18, 0
      %p81 = por %p79, %p80
      %p82 = scmp.ne.s32.totalorder %s70, %s71
      %p83 = scmp.eq.s32.totalorder %s19, 1
      %p84 = por %p82, %p83
      %p86 = scmp.ne.s32.totalorder %s71, %s85
      %p87 = scmp.eq.s32.totalorder %s19, 0
      %p88 = por %p86, %p87
      %s90 = sadd.s32 %s89, 1
      %p93 = scmp.eq.s32.totalorder %s13, 1
      %p94 = scmp.ne.s32.totalorder %s89, %s91
      %p95 = scmp.eq.s32.totalorder %s13, 0
      %p96 = por %p94, %p95
      %p97 = scmp.ne.s32.totalorder %s89, %s91
      %p98 = scmp.eq.s32.totalorder %s18, 1
      %p99 = por %p97, %p98
      %p100 = scmp.ne.s32.totalorder %s91, %s92
      %p101 = scmp.eq.s32.totalorder %s18, 0
      %p102 = por %p100, %p101
      %p103 = scmp.ne.s32.totalorder %s91, %s92
      %p104 = scmp.eq.s32.totalorder %s19, 1
      %p105 = por %p103, %p104
      %p107 = scmp.ne.s32.totalorder %s92, %s106
      %p108 = scmp.eq.s32.totalorder %s19, 0
      %p109 = por %p107, %p108
      %p110 = scmp.le.s32.totalorder 1, %s13
      %p111 = scmp.lt.s32.totalorder %s13, 3
      %p112 = pnand %p110, %p111
      %p113 = pneg %p112
      // Predicated region
      $region9: #{tpu_custom_call.1} parent=5 // pred_check
        _
      $region10: #{tpu_custom_call.1} parent=5 // pred_check_branch
        %115 = sbr.rel (%p112) target = $region12
      $region11: #{tpu_custom_call.1} parent=5 // pred_region
        %s116 = ssub.s32 %s13, 1
        // Predicated region
        $region13: #{tpu_custom_call.1} parent=11 // pred_check
          %p117 = pneg %p60
        $region14: #{tpu_custom_call.1} parent=11 // pred_check_branch
          %119 = sbr.rel (%p117) target = $region16
        $region15: #{tpu_custom_call.1} parent=11 // pred_region
          _
        $region16: #{tpu_custom_call.1} parent=11 // pred_fallthru
          _
        // Predicated region
        $region17: #{tpu_custom_call.1} parent=11 // pred_check
          %p120 = pneg %p81
        $region18: #{tpu_custom_call.1} parent=11 // pred_check_branch
          %122 = sbr.rel (%p120) target = $region20
        $region19: #{tpu_custom_call.1} parent=11 // pred_region
          _
        $region20: #{tpu_custom_call.1} parent=11 // pred_fallthru
          _
      $region12: #{tpu_custom_call.1} parent=5 // pred_fallthru
        _
      %p123 = scmp.lt.s32.totalorder %s13, 2
      // Predicated region
      $region21: #{tpu_custom_call.1} parent=5 // pred_check
        %p124 = pneg %p123
      $region22: #{tpu_custom_call.1} parent=5 // pred_check_branch
        %126 = sbr.rel (%p124) target = $region24
      $region23: #{tpu_custom_call.1} parent=5 // pred_region
        // Predicated region
        $region25: #{tpu_custom_call.1} parent=23 // pred_check
          %p127 = pneg %p33
        $region26: #{tpu_custom_call.1} parent=23 // pred_check_branch
          %129 = sbr.rel (%p127) target = $region28
        $region27: #{tpu_custom_call.1} parent=23 // pred_region
          %s130 = sand.u32 %s23, 1
          %s131 = scalar_lea.sflag [#allocation6], %s130
          %s132 = sand.u32 %s23, 1
          %s133 = smul.addr %s132, 16
          %s134 = scalar_lea.vmem [#allocation5], %s133
          %s136 = ssub.s32 256, 256
          %137 = vsyncadd %s131, %s136
          %s138 = smul.addr %s13, 4
          %s139 = smul.addr %s138, 64
          %s140 = scalar_lea.hbm %s0, %s139
          %s142 = sshll.u32 %s134, 4
          %s143 = int_to_ptr.vmem [resolvable:$true] %s142
          %145 = dma.hbm_to_vmem [thread:$0]  %s140, 256, %s143, %s131
        $region28: #{tpu_custom_call.1} parent=23 // pred_fallthru
          _
      $region24: #{tpu_custom_call.1} parent=5 // pred_fallthru
        _
      %p146 = scmp.le.s32.totalorder 1, %s13
      %p147 = scmp.lt.s32.totalorder %s13, 3
      %p148 = pnand %p146, %p147
      %p149 = pneg %p148
      // Predicated region
      $region29: #{tpu_custom_call.1} parent=5 // pred_check
        _
      $region30: #{tpu_custom_call.1} parent=5 // pred_check_branch
        %151 = sbr.rel (%p148) target = $region32
      $region31: #{tpu_custom_call.1} parent=5 // pred_region
        %s152 = ssub.s32 %s13, 1
        %s153 = sand.u32 %s26, 1
        %s154 = scalar_lea.sflag [#allocation6], %s153
        %s155 = sand.u32 %s26, 1
        %s156 = smul.addr %s155, 16
        %s157 = scalar_lea.vmem [#allocation5], %s156
        // Predicated region
        $region33: #{tpu_custom_call.1} parent=31 // pred_check
          %p158 = pneg %p39
        $region34: #{tpu_custom_call.1} parent=31 // pred_check_branch
          %160 = sbr.rel (%p158) target = $region36
        $region35: #{tpu_custom_call.1} parent=31 // pred_region
          %161 = dma.done %s154, 256
        $region36: #{tpu_custom_call.1} parent=31 // pred_fallthru
          _
        %s162 = sand.u32 %s26, 1
        %s163 = scalar_lea.sflag [#allocation6], %s162
        %s164 = sand.u32 %s26, 1
        %s165 = smul.addr %s164, 16
        %s166 = scalar_lea.vmem [#allocation5], %s165
        %p167 = pneg %p39
        %p168 = pneg %p36
        %p169 = pneg %p60
        %p170 = pneg %p57
        %p171 = pneg %p81
        %p172 = pneg %p78
        %p173 = pneg %p102
        %p174 = pneg %p99
        %p176 = scmp.eq.s32.totalorder %s18, 0
        // Predicated region
        $region37: #{tpu_custom_call.1} parent=31 // pred_check
          %p177 = pneg %p176
        $region38: #{tpu_custom_call.1} parent=31 // pred_check_branch
          %179 = sbr.rel (%p177) target = $region40
        $region39: #{tpu_custom_call.1} parent=31 // pred_region
          %180 = vst [vmem:[#allocation2] sm:$0xff] 0
          %181 = vst [vmem:[#allocation2 + $0x8] sm:$0xff] 0
          %182 = vst [vmem:[#allocation2 + $0x10] sm:$0xff] 0
          %183 = vst [vmem:[#allocation2 + $0x18] sm:$0xff] 0
          %184 = vst [vmem:[#allocation2 + $0x20] sm:$0xff] 0
          %185 = vst [vmem:[#allocation2 + $0x28] sm:$0xff] 0
          %186 = vst [vmem:[#allocation2 + $0x30] sm:$0xff] 0
          %187 = vst [vmem:[#allocation2 + $0x38] sm:$0xff] 0
          %188 = vst [vmem:[#allocation2 + $0x40] sm:$0xff] 0
          %vm189 = vcmask 7168
          %190 = vst.msk [vmem:[#allocation3] sm:$0xff] %vm189, 0.0
          %191 = vst.msk [vmem:[#allocation4] sm:$0xff] %vm189, 0.0
        $region40: #{tpu_custom_call.1} parent=31 // pred_fallthru
          _
        %v192 = vld [vmem:[%s157] sm:$0xff]
        %v193 = vld [vmem:[%s157 + $0x8] sm:$0xff]
        %v194 = vmax.f32 %v192, 0.0
        %v195 = vmax.f32 %v193, 0.0
        %v198 = vcombine.high %v194, %v194
        %v199 = vcombine.high %v195, %v195
        %v202 = vpack.c.bf16 %v194, %v194
        %v203 = vpack.c.bf16 %v198, %v198
        %v204 = vpack.c.bf16 %v195, %v195
        %v205 = vpack.c.bf16 %v199, %v199
        %206 = vst [vmem:[#allocation2] sm:$0x3] %v202
        %207 = vst [vmem:[#allocation2 + $0x8] sm:$0x3] %v203
        %208 = vst [vmem:[#allocation2 + $0x10] sm:$0x3] %v204
        %v213 = vrot.slane %v202, 6
        %v214 = vrot.slane %v203, 6
        %v215 = vrot.slane %v204, 6
        %v216 = vrot.slane %v205, 6
        %217 = vrot.lane.b32.xlu0 %v213, 127
        %v218 = vpop.permute.xlu0 %217
        %219 = vrot.lane.b32.xlu0 %v214, 127
        %v220 = vpop.permute.xlu0 %219
        %221 = vrot.lane.b32.xlu0 %v215, 127
        %v222 = vpop.permute.xlu0 %221
        %223 = vrot.lane.b32.xlu0 %v216, 127
        %v224 = vpop.permute.xlu0 %223
        %vm225 = vcmask 1039360
        %v226 = vsel %vm225, %v218, %v220
        %v227 = vsel %vm225, %v220, %v222
        %v228 = vsel %vm225, %v222, %v224
        %232 = vst [vmem:[#allocation2] sm:$0xc] %v226
        %233 = vst [vmem:[#allocation2 + $0x8] sm:$0xc] %v227
        %234 = vst [vmem:[#allocation2 + $0x10] sm:$0xc] %v228
        %v235 = vrot.slane %v202, 4
        %v236 = vrot.slane %v203, 4
        %v237 = vrot.slane %v204, 4
        %v238 = vrot.slane %v205, 4
        %239 = vrot.lane.b32.xlu0 %v235, 126
        %v240 = vpop.permute.xlu0 %239
        %241 = vrot.lane.b32.xlu0 %v236, 126
        %v242 = vpop.permute.xlu0 %241
        %243 = vrot.lane.b32.xlu0 %v237, 126
        %v244 = vpop.permute.xlu0 %243
        %245 = vrot.lane.b32.xlu0 %v238, 126
        %v246 = vpop.permute.xlu0 %245
        %vm247 = vcmask 1031168
        %v248 = vsel %vm247, %v240, %v242
        %v249 = vsel %vm247, %v242, %v244
        %v250 = vsel %vm247, %v244, %v246
        %254 = vst [vmem:[#allocation2] sm:$0x30] %v248
        %255 = vst [vmem:[#allocation2 + $0x8] sm:$0x30] %v249
        %256 = vst [vmem:[#allocation2 + $0x10] sm:$0x30] %v250
        %v257 = vrot.slane %v202, 2
        %v258 = vrot.slane %v203, 2
        %v259 = vrot.slane %v204, 2
        %v260 = vrot.slane %v205, 2
        %261 = vrot.lane.b32.xlu0 %v257, 110
        %v262 = vpop.permute.xlu0 %261
        %263 = vrot.lane.b32.xlu0 %v258, 110
        %v264 = vpop.permute.xlu0 %263
        %265 = vrot.lane.b32.xlu0 %v259, 110
        %v266 = vpop.permute.xlu0 %265
        %267 = vrot.lane.b32.xlu0 %v260, 110
        %v268 = vpop.permute.xlu0 %267
        %vm269 = vcmask 900096
        %v270 = vsel %vm269, %v262, %v264
        %v271 = vsel %vm269, %v264, %v266
        %v272 = vsel %vm269, %v266, %v268
        %276 = vst [vmem:[#allocation2] sm:$0xc0] %v270
        %277 = vst [vmem:[#allocation2 + $0x8] sm:$0xc0] %v271
        %278 = vst [vmem:[#allocation2 + $0x10] sm:$0xc0] %v272
        %279 = vrot.lane.b32.xlu0 %v202, 109
        %v280 = vpop.permute.xlu0 %279
        %281 = vrot.lane.b32.xlu0 %v203, 109
        %v282 = vpop.permute.xlu0 %281
        %283 = vrot.lane.b32.xlu0 %v204, 109
        %v284 = vpop.permute.xlu0 %283
        %285 = vrot.lane.b32.xlu0 %v205, 109
        %v286 = vpop.permute.xlu0 %285
        %vm287 = vcmask 891904
        %v288 = vsel %vm287, %v280, %v282
        %v289 = vsel %vm287, %v282, %v284
        %v290 = vsel %vm287, %v284, %v286
        %294 = vst [vmem:[#allocation2 + $0x18] sm:$0x3] %v288
        %295 = vst [vmem:[#allocation2 + $0x20] sm:$0x3] %v289
        %296 = vst [vmem:[#allocation2 + $0x28] sm:$0x3] %v290
        %297 = vrot.lane.b32.xlu0 %v213, 108
        %v298 = vpop.permute.xlu0 %297
        %299 = vrot.lane.b32.xlu0 %v214, 108
        %v300 = vpop.permute.xlu0 %299
        %301 = vrot.lane.b32.xlu0 %v215, 108
        %v302 = vpop.permute.xlu0 %301
        %303 = vrot.lane.b32.xlu0 %v216, 108
        %v304 = vpop.permute.xlu0 %303
        %vm305 = vcmask 883712
        %v306 = vsel %vm305, %v298, %v300
        %v307 = vsel %vm305, %v300, %v302
        %v308 = vsel %vm305, %v302, %v304
        %312 = vst [vmem:[#allocation2 + $0x18] sm:$0xc] %v306
        %313 = vst [vmem:[#allocation2 + $0x20] sm:$0xc] %v307
        %314 = vst [vmem:[#allocation2 + $0x28] sm:$0xc] %v308
        %315 = vrot.lane.b32.xlu0 %v235, 92
        %v316 = vpop.permute.xlu0 %315
        %317 = vrot.lane.b32.xlu0 %v236, 92
        %v318 = vpop.permute.xlu0 %317
        %319 = vrot.lane.b32.xlu0 %v237, 92
        %v320 = vpop.permute.xlu0 %319
        %321 = vrot.lane.b32.xlu0 %v238, 92
        %v322 = vpop.permute.xlu0 %321
        %vm323 = vcmask 752640
        %v324 = vsel %vm323, %v316, %v318
        %v325 = vsel %vm323, %v318, %v320
        %v326 = vsel %vm323, %v320, %v322
        %330 = vst [vmem:[#allocation2 + $0x18] sm:$0x30] %v324
        %331 = vst [vmem:[#allocation2 + $0x20] sm:$0x30] %v325
        %332 = vst [vmem:[#allocation2 + $0x28] sm:$0x30] %v326
        %333 = vrot.lane.b32.xlu0 %v257, 91
        %v334 = vpop.permute.xlu0 %333
        %335 = vrot.lane.b32.xlu0 %v258, 91
        %v336 = vpop.permute.xlu0 %335
        %337 = vrot.lane.b32.xlu0 %v259, 91
        %v338 = vpop.permute.xlu0 %337
        %339 = vrot.lane.b32.xlu0 %v260, 91
        %v340 = vpop.permute.xlu0 %339
        %vm341 = vcmask 744448
        %v342 = vsel %vm341, %v334, %v336
        %v343 = vsel %vm341, %v336, %v338
        %v344 = vsel %vm341, %v338, %v340
        %348 = vst [vmem:[#allocation2 + $0x18] sm:$0xc0] %v342
        %349 = vst [vmem:[#allocation2 + $0x20] sm:$0xc0] %v343
        %350 = vst [vmem:[#allocation2 + $0x28] sm:$0xc0] %v344
        %351 = vrot.lane.b32.xlu0 %v202, 90
        %v352 = vpop.permute.xlu0 %351
        %353 = vrot.lane.b32.xlu0 %v203, 90
        %v354 = vpop.permute.xlu0 %353
        %355 = vrot.lane.b32.xlu0 %v204, 90
        %v356 = vpop.permute.xlu0 %355
        %357 = vrot.lane.b32.xlu0 %v205, 90
        %v358 = vpop.permute.xlu0 %357
        %vm359 = vcmask 736256
        %v360 = vsel %vm359, %v352, %v354
        %v361 = vsel %vm359, %v354, %v356
        %v362 = vsel %vm359, %v356, %v358
        %366 = vst [vmem:[#allocation2 + $0x30] sm:$0x3] %v360
        %367 = vst [vmem:[#allocation2 + $0x38] sm:$0x3] %v361
        %368 = vst [vmem:[#allocation2 + $0x40] sm:$0x3] %v362
        %v369 = vld [vmem:[%s1] sm:$0xf]
        %v370 = vld [vmem:[#allocation2] sm:$0xff]
        %v371 = vld [vmem:[#allocation2 + $0x8] sm:$0xff]
        %v372 = vld [vmem:[#allocation2 + $0x10] sm:$0xff]
        %v373 = vld [vmem:[#allocation2 + $0x18] sm:$0xff]
        %v374 = vld [vmem:[#allocation2 + $0x20] sm:$0xff]
        %v375 = vld [vmem:[#allocation2 + $0x28] sm:$0xff]
        %v376 = vld [vmem:[#allocation2 + $0x30] sm:$0xff]
        %v377 = vld [vmem:[#allocation2 + $0x38] sm:$0xff]
        %v378 = vld [vmem:[#allocation2 + $0x40] sm:$0xff]
        %vm379 = vcmask 392192
        %v381 = vsel %vm379, %v369, 0
        %383 = vmatprep.subr.bf16.mxu0 %v371
        %384 = vmatpush1.bf16.msra.mxu0 %v370
        %385 = vmatprep.subr.bf16.mxu0 %v374
        %386 = vmatpush1.bf16.msra.mxu0 %v373
        %387 = vmatprep.subr.bf16.mxu0 %v377
        %388 = vmatpush1.bf16.msra.mxu0 %v376
        %389 = vmatprep.subr.bf16.mxu0 0
        %390 = vmatpush1.bf16.msra.mxu0 0
        %391 = vmatprep.subr.bf16.mxu0 0
        %392 = vmatpush1.bf16.msra.mxu0 0
        %393 = vmatprep.subr.bf16.mxu0 0
        %394 = vmatpush1.bf16.msra.mxu0 0
        %395 = vmatprep.subr.bf16.mxu0 0
        %396 = vmatpush1.bf16.msra.mxu0 0
        %397 = vmatprep.subr.bf16.mxu0 0
        %398 = vmatpush1.bf16.msra.mxu0 0
        %399 = vmatprep.subr.bf16.mxu0 0
        %400 = vmatpush1.bf16.msra.mxu0 0
        %401 = vmatprep.subr.bf16.mxu0 0
        %402 = vmatpush1.bf16.msra.mxu0 0
        %403 = vmatprep.subr.bf16.mxu0 0
        %404 = vmatpush1.bf16.msra.mxu0 0
        %405 = vmatprep.subr.bf16.mxu0 0
        %406 = vmatpush1.bf16.msra.mxu0 0
        %407 = vmatprep.subr.bf16.mxu0 0
        %408 = vmatpush1.bf16.msra.mxu0 0
        %409 = vmatprep.subr.bf16.mxu0 0
        %410 = vmatpush1.bf16.msra.mxu0 0
        %411 = vmatprep.subr.bf16.mxu0 0
        %412 = vmatpush1.bf16.msra.mxu0 0
        %413 = vmatprep.subr.bf16.mxu0 0
        %414 = vmatpush1.bf16.msra.mxu0 0
        %415 = vmatprep.mubr.bf16.mxu0 0
        %416 = vmatmul.mubr.bf16.gmra.mrb[0].mxu0 %v381
        %v417 = vpop.f32.mrb[0].mxu0
        %v418 = vadd.f32 0.0, %v417
        %v419 = vpop.f32.mrb[0].mxu0
        %v420 = vadd.f32 0.0, %v419
        %v421 = vpop.f32.mrb[0].mxu0
        %v422 = vpop.f32.mrb[0].mxu0
        %423 = vdwg.mxu0
        %424 = vmatprep.subr.bf16.mxu0 0
        %425 = vmatpush1.bf16.msra.mxu0 %v372
        %426 = vmatprep.subr.bf16.mxu0 0
        %427 = vmatpush1.bf16.msra.mxu0 %v375
        %428 = vmatprep.subr.bf16.mxu0 0
        %429 = vmatpush1.bf16.msra.mxu0 %v378
        %430 = vmatprep.subr.bf16.mxu0 0
        %431 = vmatpush1.bf16.msra.mxu0 0
        %432 = vmatprep.subr.bf16.mxu0 0
        %433 = vmatpush1.bf16.msra.mxu0 0
        %434 = vmatprep.subr.bf16.mxu0 0
        %435 = vmatpush1.bf16.msra.mxu0 0
        %436 = vmatprep.subr.bf16.mxu0 0
        %437 = vmatpush1.bf16.msra.mxu0 0
        %438 = vmatprep.subr.bf16.mxu0 0
        %439 = vmatpush1.bf16.msra.mxu0 0
        %440 = vmatprep.subr.bf16.mxu0 0
        %441 = vmatpush1.bf16.msra.mxu0 0
        %442 = vmatprep.subr.bf16.mxu0 0
        %443 = vmatpush1.bf16.msra.mxu0 0
        %444 = vmatprep.subr.bf16.mxu0 0
        %445 = vmatpush1.bf16.msra.mxu0 0
        %446 = vmatprep.subr.bf16.mxu0 0
        %447 = vmatpush1.bf16.msra.mxu0 0
        %448 = vmatprep.subr.bf16.mxu0 0
        %449 = vmatpush1.bf16.msra.mxu0 0
        %450 = vmatprep.subr.bf16.mxu0 0
        %451 = vmatpush1.bf16.msra.mxu0 0
        %452 = vmatprep.subr.bf16.mxu0 0
        %453 = vmatpush1.bf16.msra.mxu0 0
        %454 = vmatprep.subr.bf16.mxu0 0
        %455 = vmatpush1.bf16.msra.mxu0 0
        %456 = vmatprep.mubr.bf16.mxu0 0
        %457 = vmatmul.mubr.bf16.gmra.mrb[0].mxu0 %v381
        %v458 = vpop.f32.mrb[0].mxu0
        %v459 = vadd.f32 0.0, %v458
        %v460 = vpop.f32.mrb[0].mxu0
        %v461 = vpop.f32.mrb[0].mxu0
        %v462 = vpop.f32.mrb[0].mxu0
        %463 = vdwg.mxu0
        %s464 = smul.u32 %s18, 3
        %s465 = smul.addr %s464, 8
        %s466 = scalar_lea.vmem [#allocation8], %s465
        %467 = vst [vmem:[%s466] sm:$0xff] %v418
        %468 = vst [vmem:[%s466 + $0x8] sm:$0xff] %v420
        %469 = vst [vmem:[%s466 + $0x10] sm:$0xff] %v459
        %v470 = vlaneseq
        %v471 = vand.u32 %v470, 127
        %v472 = vadd.s32 %v471, 128
        %v473 = vadd.s32 %v471, 256
        %vm474 = vcmp.lt.s32.totalorder %v471, 0
        %v475 = vsub.s32 0, %v471
        %v476 = vsel %vm474, %v475, %v471
        %v477 = vmul.u32.u64.compose %v476, 3817748708
        %v478 = vextract.low.u32 %v477
        %v479 = vextract.high.u32 %v477
        %v480 = vshrl.u32 %v479, 4
        %v481 = vmul.u32 %v480, 18
        %v482 = vsub.s32 %v476, %v481
        %v483 = vsub.s32 0, %v482
        %v484 = vsel %vm474, %v483, %v482
        %vm485 = vcmp.lt.s32.totalorder %v472, 0
        %v486 = vsub.s32 0, %v472
        %v487 = vsel %vm485, %v486, %v472
        %v488 = vmul.u32.u64.compose %v487, 3817748708
        %v489 = vextract.low.u32 %v488
        %v490 = vextract.high.u32 %v488
        %v491 = vshrl.u32 %v490, 4
        %v492 = vmul.u32 %v491, 18
        %v493 = vsub.s32 %v487, %v492
        %v494 = vsub.s32 0, %v493
        %v495 = vsel %vm485, %v494, %v493
        %vm496 = vcmp.lt.s32.totalorder %v473, 0
        %v497 = vsub.s32 0, %v473
        %v498 = vsel %vm496, %v497, %v473
        %v499 = vmul.u32.u64.compose %v498, 3817748708
        %v500 = vextract.low.u32 %v499
        %v501 = vextract.high.u32 %v499
        %v502 = vshrl.u32 %v501, 4
        %v503 = vmul.u32 %v502, 18
        %v504 = vsub.s32 %v498, %v503
        %v505 = vsub.s32 0, %v504
        %v506 = vsel %vm496, %v505, %v504
        %vm507 = vcmp.ne.s32.totalorder %v484, 0
        %vm508 = vcmp.ne.s32.totalorder %v495, 0
        %vm509 = vcmp.ne.s32.totalorder %v506, 0
        %vm510 = vcmp.lt.s32.totalorder %v484, 0
        %vm511 = vcmp.lt.s32.totalorder %v495, 0
        %vm512 = vcmp.lt.s32.totalorder %v506, 0
        %vm513 = vmand %vm510, %vm507
        %vm514 = vmand %vm511, %vm508
        %vm515 = vmand %vm512, %vm509
        %v516 = vadd.s32 %v484, 18
        %v517 = vadd.s32 %v495, 18
        %v518 = vadd.s32 %v506, 18
        %v519 = vsel %vm513, %v516, %v484
        %v520 = vsel %vm514, %v517, %v495
        %v521 = vsel %vm515, %v518, %v506
        %vm522 = vcmp.lt.s32.totalorder %v519, 16
        %vm523 = vcmp.lt.s32.totalorder %v520, 16
        %vm524 = vcmp.lt.s32.totalorder %v521, 16
        %vm525 = vcmp.lt.s32.totalorder %v471, 288
        %vm526 = vcmp.lt.s32.totalorder %v472, 288
        %vm527 = vcmp.lt.s32.totalorder %v473, 288
        %vm528 = vmand %vm522, %vm525
        %vm529 = vmand %vm523, %vm526
        %vm530 = vmand %vm524, %vm527
        %v531 = vsel %vm528, 1, 0
        %v532 = vsel %vm529, 1, 0
        %v533 = vsel %vm530, 1, 0
        %vm534 = vcmp.eq.s32.totalorder %v531, 1
        %vm535 = vcmp.eq.s32.totalorder %v532, 1
        %vm536 = vcmp.eq.s32.totalorder %v533, 1
        %v537 = vsel %vm534, %v418, 0.0
        %v538 = vsel %vm535, %v420, 0.0
        %v539 = vsel %vm536, %v459, 0.0
        %v540 = vld [vmem:[#allocation3] sm:$0xff]
        %v541 = vadd.f32 %v537, %v538
        %v542 = vadd.f32 %v541, %v539
        %543 = vadd.xlane.f32.xlu0 %v542
        %v544 = vpop.xlane.xlu0 %543
        %v545 = vadd.f32 %v540, %v544
        %vm546 = vcmask 7168
        %547 = vst.msk [vmem:[#allocation3] sm:$0xff] %vm546, %v545
        %v548 = vld [vmem:[#allocation4] sm:$0xff]
        %v549 = vmul.f32 %v537, %v537
        %v550 = vmul.f32 %v538, %v538
        %v551 = vmul.f32 %v539, %v539
        %v552 = vadd.f32 %v549, %v550
        %v553 = vadd.f32 %v552, %v551
        %554 = vadd.xlane.f32.xlu0 %v553
        %v555 = vpop.xlane.xlu0 %554
        %v556 = vadd.f32 %v548, %v555
        %557 = vst.msk [vmem:[#allocation4] sm:$0xff] %vm546, %v556
        %p558 = scmp.eq.s32.totalorder %s18, 1
        // Predicated region
        $region41: #{tpu_custom_call.1} parent=31 // pred_check
          %p559 = pneg %p558
        $region42: #{tpu_custom_call.1} parent=31 // pred_check_branch
          %561 = sbr.rel (%p559) target = $region44
        $region43: #{tpu_custom_call.1} parent=31 // pred_region
          %v562 = vld [vmem:[#allocation3] sm:$0xff]
          %v563 = vrcp.pop 512.0
          %v564 = vmul.f32 %v562, %v563
          %v565 = vld [vmem:[#allocation4] sm:$0xff]
          %v566 = vmul.f32 %v565, %v563
          %v567 = vmul.f32 %v564, %v564
          %v568 = vsub.f32 %v566, %v567
          %v569 = vld [vmem:[%s2] sm:$0xff]
          %v570 = vadd.f32 %v568, 1e-05
          %v571 = vrsqrt.pop %v570
          %v572 = vmul.f32 %v569, %v571
          %v573 = vmul.f32 %v564, %v572
          %575 = vrot.lane.b32.xlu0 %v573, 1
          %v576 = vpop.permute.xlu0 %575
          %v578 = vsub.f32 %v569, %v576
          %v579 = vld [vmem:[#allocation8] sm:$0xff]
          %v580 = vld [vmem:[#allocation8 + $0x8] sm:$0xff]
          %v581 = vld [vmem:[#allocation8 + $0x10] sm:$0xff]
          %583 = vset.pattern.permute.xlu0 0
          %584 = vperm.xlu0 %583, %v572
          %v585 = vpop.permute.xlu0 %584
          %v587 = vmul.f32 %v579, %v585
          %v588 = vmul.f32 %v580, %v585
          %v589 = vmul.f32 %v581, %v585
          %591 = vset.pattern.permute.xlu0 1
          %592 = vperm.xlu0 %591, %v578
          %v593 = vpop.permute.xlu0 %592
          %v595 = vadd.f32 %v587, %v593
          %v596 = vadd.f32 %v588, %v593
          %v597 = vadd.f32 %v589, %v593
          %598 = vst [vmem:[#allocation8] sm:$0xff] %v595
          %599 = vst [vmem:[#allocation8 + $0x8] sm:$0xff] %v596
          %600 = vst [vmem:[#allocation8 + $0x10] sm:$0xff] %v597
          %s601 = scalar_lea.vmem [#allocation8], 24
          %v602 = vld [vmem:[%s601] sm:$0xff]
          %v603 = vld [vmem:[%s601 + $0x8] sm:$0xff]
          %v604 = vld [vmem:[%s601 + $0x10] sm:$0xff]
          %v605 = vmul.f32 %v602, %v585
          %v606 = vmul.f32 %v603, %v585
          %v607 = vmul.f32 %v604, %v585
          %v608 = vadd.f32 %v605, %v593
          %v609 = vadd.f32 %v606, %v593
          %v610 = vadd.f32 %v607, %v593
          %611 = vst [vmem:[%s601] sm:$0xff] %v608
          %612 = vst [vmem:[%s601 + $0x8] sm:$0xff] %v609
          %613 = vst [vmem:[%s601 + $0x10] sm:$0xff] %v610
        $region44: #{tpu_custom_call.1} parent=31 // pred_fallthru
          _
        // Predicated region
        $region45: #{tpu_custom_call.1} parent=31 // pred_check
          %p614 = pneg %p99
        $region46: #{tpu_custom_call.1} parent=31 // pred_check_branch
          %616 = sbr.rel (%p614) target = $region48
        $region47: #{tpu_custom_call.1} parent=31 // pred_region
          %s618 = ssub.s32 768, 768
          %619 = vsyncadd [#allocation7], %s618
          %s620 = sshll.u32 [#allocation8], 4
          %s621 = int_to_ptr.vmem [resolvable:$true] %s620
          %626 = dma.vmem_to_hbm [thread:$0]  %s621, 768, %s3, [#allocation7], 384, 384, 24
        $region48: #{tpu_custom_call.1} parent=31 // pred_fallthru
          _
        // Predicated region
        $region49: #{tpu_custom_call.1} parent=31 // pred_check
          %p627 = pneg %p99
        $region50: #{tpu_custom_call.1} parent=31 // pred_check_branch
          %629 = sbr.rel (%p627) target = $region52
        $region51: #{tpu_custom_call.1} parent=31 // pred_region
          %630 = dma.done [#allocation7], 768
        $region52: #{tpu_custom_call.1} parent=31 // pred_fallthru
          _
      $region32: #{tpu_custom_call.1} parent=5 // pred_fallthru
        _
      %p631 = scmp.le.s32.totalorder 2, %s13
      // Predicated region
      $region53: #{tpu_custom_call.1} parent=5 // pred_check
        %p632 = pneg %p631
      $region54: #{tpu_custom_call.1} parent=5 // pred_check_branch
        %634 = sbr.rel (%p632) target = $region56
      $region55: #{tpu_custom_call.1} parent=5 // pred_region
        %s635 = ssub.s32 %s13, 2
      $region56: #{tpu_custom_call.1} parent=5 // pred_fallthru
        _
    $region6: #{tpu_custom_call.1} parent=1 // loop_footer
      %s17 = sadd.s32 1, %s13
    $region7: #{tpu_custom_call.1} parent=1 // loop_footer_branch
      %12 = sbr.rel target = $region3
    $region8: #{tpu_custom_call.1} parent=1 // loop_exit
      _
    %636 = vsyncpa [#allocation6], 1
    %s637 = scalar_lea.sflag [#allocation6], 1
    %638 = vsyncpa %s637, 1
    %639 = vsyncpa [#allocation7], 1
    %s640 = scalar_lea.sflag [#allocation7], 1
    %641 = vsyncpa %s640, 1

</llo_original>
